<compile_context>
chip_gen: v6e
topology: v6e:2x2x1
jax: 0.10.0
libtpu: 0.0.40
codegen_flags: <defaults>
</compile_context>

<pallas_src>
import functools

import jax
import jax.numpy as jnp
from jax.experimental import pallas as pl
from jax.experimental.pallas import tpu as pltpu


_LANE = 128   # lane width (last dim)
_MXU = 128    # MXU-aligned row tiling for the batch dimension


def _round_up(n, m):
    return ((n + m - 1) // m) * m


def _cdiv(a, b):
    return -(-a // b)


def _pad_to(a, shape):
    pads = [(0, s - d) for d, s in zip(a.shape, shape)]
    if all(p == (0, 0) for p in pads):
        return a
    return jnp.pad(a, pads)


def mlp_kernel(x_ref, w1_ref, w2_ref, w3_ref, w4_ref, o_ref):
    """relu(relu(relu(x@w1)@w2)@w3)@w4 on one batch tile; f32 MXU accumulation."""
    cdt = w1_ref.dtype                       # compute (MXU input) dtype, e.g. bf16
    x = x_ref[...].astype(cdt)               # in-kernel cast (hidden under 1st matmul)
    h = jnp.dot(x, w1_ref[...], preferred_element_type=jnp.float32)
    h = jnp.maximum(h, 0.0).astype(cdt)      # re-cast so each dot stays on the bf16 MXU path
    h = jnp.dot(h, w2_ref[...], preferred_element_type=jnp.float32)
    h = jnp.maximum(h, 0.0).astype(cdt)
    h = jnp.dot(h, w3_ref[...], preferred_element_type=jnp.float32)
    h = jnp.maximum(h, 0.0).astype(cdt)
    o_ref[...] = jnp.dot(h, w4_ref[...],
                         preferred_element_type=jnp.float32).astype(o_ref.dtype)


def _choose_tb(B, tb_cap, in_p, hid_p, out_p, x_itemsize, out_itemsize, w_bytes):
    """MXU-aligned batch tile; >=2 grid steps when B > 128; VMEM-budget aware."""
    B_aligned = _round_up(B, _MXU)
    if B_aligned <= _MXU:
        return _MXU
    tb = min(_round_up(max(tb_cap, _MXU), _MXU),
             _round_up(_cdiv(B_aligned, 2), _MXU))   # guarantees >= 2 grid steps
    tb = max(tb, _MXU)

    # Shrink until per-step footprint fits a conservative (v7x-safe) VMEM budget.
    budget = 56 * 1024 * 1024

    def footprint(t):
        return (w_bytes                              # resident weights (single-buffered)
                + 2 * t * in_p * x_itemsize          # x tile, double-buffered
                + 2 * t * out_p * out_itemsize       # out tile, double-buffered
                + 3 * t * hid_p * 4)                 # f32 activation temporaries (headroom)

    while tb > _MXU and footprint(tb) > budget:
        tb = max(_MXU, _round_up(tb // 2, _MXU))
    return tb


@functools.partial(jax.jit, static_argnames=("out_dim", "tb_cap", "out_dtype"))
def _forward(x, w1p, w2p, w3p, w4p, *, out_dim, tb_cap, out_dtype):
    B, in_dim = x.shape
    in_p, hid_p = w1p.shape
    out_p = w4p.shape[1]
    out_dt = jnp.dtype(out_dtype)

    w_bytes = sum(int(w.size) * w.dtype.itemsize for w in (w1p, w2p, w3p, w4p))
    tb_eff = _choose_tb(B, tb_cap, in_p, hid_p, out_p,
                        x.dtype.itemsize, out_dt.itemsize, w_bytes)
    B_p = _round_up(B, tb_eff)
    grid = (B_p // tb_eff,)

    # Pad x only if needed; no cast here (kernel casts to the compute dtype).
    if B_p == B and in_p == in_dim:
        xp = x
    else:
        xp = jnp.pad(x, ((0, B_p - B), (0, in_p - in_dim)))

    # VMEM limit computed from the actual footprint (+8 MiB headroom), clamped to
    # a range that is safe on v5e/v6e (128 MiB) and not silly-small.
    footprint = (w_bytes
                 + 2 * tb_eff * in_p * xp.dtype.itemsize
                 + 2 * tb_eff * out_p * out_dt.itemsize
                 + 3 * tb_eff * hid_p * 4
                 + 8 * 1024 * 1024)
    vmem_limit = int(min(96 * 1024 * 1024, max(32 * 1024 * 1024, footprint)))

    flops = 2 * B_p * (in_p * hid_p + 2 * hid_p * hid_p + hid_p * out_p)
    bytes_accessed = (int(xp.size) * xp.dtype.itemsize
                      + w_bytes
                      + B_p * out_p * out_dt.itemsize)
    cost = pl.CostEstimate(flops=flops, transcendentals=0,
                           bytes_accessed=bytes_accessed)

    # Whole-array, single-buffered resident weights in VMEM (no double-buffer copy).
    w_spec = pl.BlockSpec(memory_space=pltpu.MemorySpace.VMEM)

    out_padded = pl.pallas_call(
        mlp_kernel,
        out_shape=jax.ShapeDtypeStruct((B_p, out_p), out_dt),
        grid_spec=pltpu.PrefetchScalarGridSpec(
            num_scalar_prefetch=0,
            grid=grid,
            in_specs=[
                pl.BlockSpec((tb_eff, in_p), lambda i: (i, 0)),   # x tiled over batch
                w_spec, w_spec, w_spec, w_spec,                   # weights resident
            ],
            out_specs=pl.BlockSpec((tb_eff, out_p), lambda i: (i, 0)),
        ),
        compiler_params=pltpu.CompilerParams(
            dimension_semantics=("parallel",),   # batch tiles shard across TCs (v7x)
            vmem_limit_bytes=vmem_limit,
        ),
        cost_estimate=cost,
    )(xp, w1p, w2p, w3p, w4p)

    return out_padded[:B, :out_dim]


class PallasNet:
    """Fused bias-free 4-layer MLP. Weights are padded + cast to bf16 exactly once."""

    def __init__(self, w1, w2, w3, w4, *, compute_dtype=jnp.bfloat16,
                 out_dtype=None, tb=1024):
        in_dim, hid = w1.shape
        out_dim = w4.shape[1]
        in_p = _round_up(in_dim, _LANE)
        hid_p = _round_up(hid, _LANE)
        out_p = _round_up(out_dim, _LANE)
        # One-time pad + cast (zero padding is exact for bias-free linears + ReLU).
        self.w1p = _pad_to(w1, (in_p, hid_p)).astype(compute_dtype)
        self.w2p = _pad_to(w2, (hid_p, hid_p)).astype(compute_dtype)
        self.w3p = _pad_to(w3, (hid_p, hid_p)).astype(compute_dtype)
        self.w4p = _pad_to(w4, (hid_p, out_p)).astype(compute_dtype)
        self.out_dim = out_dim
        self.out_dtype = jnp.dtype(out_dtype if out_dtype is not None else compute_dtype)
        self.tb = tb

    def __call__(self, x):
        return _forward(x, self.w1p, self.w2p, self.w3p, self.w4p,
                        out_dim=self.out_dim, tb_cap=self.tb,
                        out_dtype=self.out_dtype.name)


def init_params(key, in_dim, out_dim, hidden_size):
    """PyTorch-Linear-style init (uniform +/- 1/sqrt(fan_in)); weights as (fan_in, fan_out)."""
    dims = [(in_dim, hidden_size),
            (hidden_size, hidden_size),
            (hidden_size, hidden_size),
            (hidden_size, out_dim)]
    keys = jax.random.split(key, len(dims))
    ws = []
    for k, (fi, fo) in zip(keys, dims):
        bound = 1.0 / (fi ** 0.5)
        ws.append(jax.random.uniform(k, (fi, fo), jnp.float32, -bound, bound))
    return ws


def net_forward_ref(x, w1, w2, w3, w4, compute_dtype=jnp.bfloat16):
    """Pure-JAX reference mirroring the kernel's cast/accumulate scheme (f32 result)."""
    c = lambda a: a.astype(compute_dtype)
    h = jnp.dot(c(x), c(w1), preferred_element_type=jnp.float32)
    h = jnp.maximum(h, 0.0)
    h = jnp.dot(c(h), c(w2), preferred_element_type=jnp.float32)
    h = jnp.maximum(h, 0.0)
    h = jnp.dot(c(h), c(w3), preferred_element_type=jnp.float32)
    h = jnp.maximum(h, 0.0)
    return jnp.dot(c(h), c(w4), preferred_element_type=jnp.float32)


if __name__ == "__main__":
    # Small shapes consistent with the module's Linear-only forward
    # (bias=False, bn=False, penultimate=False, n_hidden=2).
    batch, in_dim, hidden, out_dim = 200, 16, 32, 8

    key = jax.random.PRNGKey(0)
    kx, kp = jax.random.split(key)
    x = jax.random.normal(kx, (batch, in_dim), jnp.float32)
    w1, w2, w3, w4 = init_params(kp, in_dim, out_dim, hidden)

    net = PallasNet(w1, w2, w3, w4)   # weights padded + cast to bf16 once, here

    ref = net_forward_ref(x, w1, w2, w3, w4)

    # Multi-step grid path (batch 200 -> padded 256, two 128-row tiles, "parallel").
    out = jax.block_until_ready(net(x))
    assert out.shape == (batch, out_dim)
    assert jnp.allclose(out.astype(jnp.float32), ref, atol=2e-2, rtol=2e-2), \
        "multi-tile mismatch"

    # Single-tile path (small batch -> one 128-row tile).
    x_small = x[:64]
    out_small = jax.block_until_ready(net(x_small))
    ref_small = net_forward_ref(x_small, w1, w2, w3, w4)
    assert out_small.shape == (64, out_dim)
    assert jnp.allclose(out_small.astype(jnp.float32), ref_small, atol=2e-2, rtol=2e-2), \
        "single-tile mismatch"

    print("KERNEL_OK")
</pallas_src>

<mosaic_0001>
module attributes {stable_mosaic.version = 11 : i64} {
  func.func @mlp_kernel(%arg0: i32, %arg1: memref<128x128xf32, #tpu.memory_space<vmem>>, %arg2: memref<128x128xbf16, #tpu.memory_space<vmem>>, %arg3: memref<128x128xbf16, #tpu.memory_space<vmem>>, %arg4: memref<128x128xbf16, #tpu.memory_space<vmem>>, %arg5: memref<128x128xbf16, #tpu.memory_space<vmem>>, %arg6: memref<128x128xbf16, #tpu.memory_space<vmem>>) attributes {dimension_semantics = [#tpu.dimension_semantics<parallel>], iteration_bounds = array<i64: 2>, scalar_prefetch = 0 : i64, scratch_operands = 0 : i64, tpu.core_type = #tpu.core_type<tc>, window_params = [{transform_indices = @transform_0, window_bounds = array<i64: 128, 128>}, {pipeline_mode = #tpu.pipeline_mode<synchronous>, transform_indices = @transform_1, window_bounds = array<i64: 128, 128>}, {pipeline_mode = #tpu.pipeline_mode<synchronous>, transform_indices = @transform_2, window_bounds = array<i64: 128, 128>}, {pipeline_mode = #tpu.pipeline_mode<synchronous>, transform_indices = @transform_3, window_bounds = array<i64: 128, 128>}, {pipeline_mode = #tpu.pipeline_mode<synchronous>, transform_indices = @transform_4, window_bounds = array<i64: 128, 128>}, {transform_indices = @transform_5, window_bounds = array<i64: 128, 128>}]} {
    %c0 = arith.constant 0 : index
    %c0_0 = arith.constant 0 : index
    %0 = vector.load %arg1[%c0, %c0_0] : memref<128x128xf32, #tpu.memory_space<vmem>>, vector<128x128xf32>
    %1 = arith.truncf %0 : vector<128x128xf32> to vector<128x128xbf16>
    %c0_1 = arith.constant 0 : index
    %c0_2 = arith.constant 0 : index
    %2 = vector.load %arg2[%c0_1, %c0_2] : memref<128x128xbf16, #tpu.memory_space<vmem>>, vector<128x128xbf16>
    %cst = arith.constant dense<0.000000e+00> : vector<128x128xf32>
    %3 = tpu.matmul %1, %2, %cst {dimension_numbers = #tpu.dot_dimension_numbers<[1], [0], [0], [1], [0, 0, 1, 1], [], []>} : vector<128x128xbf16>, vector<128x128xbf16>, vector<128x128xf32> -> vector<128x128xf32>
    %cst_3 = arith.constant 0.000000e+00 : f32
    %4 = vector.broadcast %cst_3 : f32 to vector<128x128xf32>
    %5 = arith.maximumf %3, %4 : vector<128x128xf32>
    %6 = arith.truncf %5 : vector<128x128xf32> to vector<128x128xbf16>
    %c0_4 = arith.constant 0 : index
    %c0_5 = arith.constant 0 : index
    %7 = vector.load %arg3[%c0_4, %c0_5] : memref<128x128xbf16, #tpu.memory_space<vmem>>, vector<128x128xbf16>
    %cst_6 = arith.constant dense<0.000000e+00> : vector<128x128xf32>
    %8 = tpu.matmul %6, %7, %cst_6 {dimension_numbers = #tpu.dot_dimension_numbers<[1], [0], [0], [1], [0, 0, 1, 1], [], []>} : vector<128x128xbf16>, vector<128x128xbf16>, vector<128x128xf32> -> vector<128x128xf32>
    %cst_7 = arith.constant 0.000000e+00 : f32
    %9 = vector.broadcast %cst_7 : f32 to vector<128x128xf32>
    %10 = arith.maximumf %8, %9 : vector<128x128xf32>
    %11 = arith.truncf %10 : vector<128x128xf32> to vector<128x128xbf16>
    %c0_8 = arith.constant 0 : index
    %c0_9 = arith.constant 0 : index
    %12 = vector.load %arg4[%c0_8, %c0_9] : memref<128x128xbf16, #tpu.memory_space<vmem>>, vector<128x128xbf16>
    %cst_10 = arith.constant dense<0.000000e+00> : vector<128x128xf32>
    %13 = tpu.matmul %11, %12, %cst_10 {dimension_numbers = #tpu.dot_dimension_numbers<[1], [0], [0], [1], [0, 0, 1, 1], [], []>} : vector<128x128xbf16>, vector<128x128xbf16>, vector<128x128xf32> -> vector<128x128xf32>
    %cst_11 = arith.constant 0.000000e+00 : f32
    %14 = vector.broadcast %cst_11 : f32 to vector<128x128xf32>
    %15 = arith.maximumf %13, %14 : vector<128x128xf32>
    %16 = arith.truncf %15 : vector<128x128xf32> to vector<128x128xbf16>
    %c0_12 = arith.constant 0 : index
    %c0_13 = arith.constant 0 : index
    %17 = vector.load %arg5[%c0_12, %c0_13] : memref<128x128xbf16, #tpu.memory_space<vmem>>, vector<128x128xbf16>
    %cst_14 = arith.constant dense<0.000000e+00> : vector<128x128xf32>
    %18 = tpu.matmul %16, %17, %cst_14 {dimension_numbers = #tpu.dot_dimension_numbers<[1], [0], [0], [1], [0, 0, 1, 1], [], []>} : vector<128x128xbf16>, vector<128x128xbf16>, vector<128x128xf32> -> vector<128x128xf32>
    %19 = arith.truncf %18 : vector<128x128xf32> to vector<128x128xbf16>
    %c0_15 = arith.constant 0 : index
    %c0_16 = arith.constant 0 : index
    %20 = vector.load %arg6[%c0_15, %c0_16] : memref<128x128xbf16, #tpu.memory_space<vmem>>, vector<128x128xbf16>
    tpu.vector_store %arg6[%c0_15, %c0_16], %19 {strides = array<i32>} : memref<128x128xbf16, #tpu.memory_space<vmem>>, vector<128x128xbf16>,
    return
  }
  func.func @transform_0(%arg0: i32) -> (i32, i32) {
    %c0_i32 = arith.constant 0 : i32
    %c0_i32_0 = arith.constant 0 : i32
    return %arg0, %c0_i32 : i32, i32
  }
  func.func @transform_1(%arg0: i32) -> (i32, i32) {
    %c0_i32 = arith.constant 0 : i32
    %c0_i32_0 = arith.constant 0 : i32
    %c0_i32_1 = arith.constant 0 : i32
    return %c0_i32, %c0_i32_0 : i32, i32
  }
  func.func @transform_2(%arg0: i32) -> (i32, i32) {
    %c0_i32 = arith.constant 0 : i32
    %c0_i32_0 = arith.constant 0 : i32
    %c0_i32_1 = arith.constant 0 : i32
    return %c0_i32, %c0_i32_0 : i32, i32
  }
  func.func @transform_3(%arg0: i32) -> (i32, i32) {
    %c0_i32 = arith.constant 0 : i32
    %c0_i32_0 = arith.constant 0 : i32
    %c0_i32_1 = arith.constant 0 : i32
    return %c0_i32, %c0_i32_0 : i32, i32
  }
  func.func @transform_4(%arg0: i32) -> (i32, i32) {
    %c0_i32 = arith.constant 0 : i32
    %c0_i32_0 = arith.constant 0 : i32
    %c0_i32_1 = arith.constant 0 : i32
    return %c0_i32, %c0_i32_0 : i32, i32
  }
  func.func @transform_5(%arg0: i32) -> (i32, i32) {
    %c0_i32 = arith.constant 0 : i32
    %c0_i32_0 = arith.constant 0 : i32
    return %arg0, %c0_i32 : i32, i32
  }
}

</mosaic_0001>

<llo_original>
// kernel: _forward.1
$region0: #{_forward.1}
  #allocation0 [shape = 'u32[]', space=smem, size = 0x4, offset = 0x4, fixed_abs, tag = 'smem constant byte address 0x4 - core index']
  #allocation1 [shape = 'u32[144,128]{1,0:T(1,128)}', space=vmem, size = 0x12000, scoped, tag = 'internal scratch']
  %s0 = inlined_call_operand.vmem [shape: f32[256,128], index: 0, kind: input, shape index: {}]
  %s1 = inlined_call_operand.vmem [shape: bf16[128,128], index: 1, kind: input, shape index: {}]
  %s2 = inlined_call_operand.vmem [shape: bf16[128,128], index: 2, kind: input, shape index: {}]
  %s3 = inlined_call_operand.vmem [shape: bf16[128,128], index: 3, kind: input, shape index: {}]
  %s4 = inlined_call_operand.vmem [shape: bf16[128,128], index: 4, kind: input, shape index: {}]
  %s5 = inlined_call_operand.vmem [shape: bf16[256,128], index: 5, kind: output, shape index: {}]
  %s6 = sld [smem:[#allocation0]]
  $region53: #{_forward.1} parent=0
    _
  %s8 = ssub.s32 1, %s6
  %s9 = scalar_select 0, %s8, %s6
  loop: start=0, step=1, limit=4
  $region2: #{_forward.1} parent=0 // loop_pre_header
    _
  $region3: #{_forward.1} parent=0 // loop_header
    %s11 = sphi 0, %s15
    %p12 = scmp.ge.s32.totalorder %s11, 4
    %s21 = sphi 0, %s23
    %s24 = sphi 0, %s21
    %s25 = sphi 0, %s24
    %s41 = sphi 0, %s25
    %s45 = sphi 0, %s45
    %s47 = sphi 0, %s45
    %s48 = sphi 0, %s47
    %s62 = sphi 0, %s48
    %s66 = sphi 0, %s66
    %s68 = sphi 0, %s66
    %s69 = sphi 0, %s68
    %s83 = sphi 0, %s69
    %s87 = sphi 0, %s87
    %s89 = sphi 0, %s87
    %s90 = sphi 0, %s89
    %s104 = sphi 0, %s90
    %s108 = sphi 0, %s108
    %s110 = sphi 0, %s108
    %s111 = sphi 0, %s110
    %s125 = sphi 0, %s111
    %s131 = sphi 0, %s133
    %s134 = sphi 0, %s131
    %s135 = sphi 0, %s134
    %s151 = sphi 0, %s135
  $region4: #{_forward.1} parent=0 // loop_header_branch
    %14 = sbr.rel (%p12) target = $region8
  $region5: #{_forward.1} parent=0 // loop_body
    %s16 = ssub.s32 %s11, 1
    %s17 = ssub.s32 %s11, 2
    %s18 = sadd.s32 %s11, 1
    %s19 = ssub.s32 %s11, %s18
    %p20 = scmp.eq.s32.totalorder %s19, 0
    %s22 = sadd.s32 %s21, 1
    %s23 = scalar_select %p20, %s21, %s22
    %p26 = pneg %p20
    %p27 = scmp.eq.s32.totalorder %s11, 1
    %p28 = por %p26, %p27
    %p29 = scmp.ne.s32.totalorder %s21, %s24
    %p30 = scmp.eq.s32.totalorder %s11, 0
    %p31 = por %p29, %p30
    %p32 = scmp.ne.s32.totalorder %s21, %s24
    %p33 = scmp.eq.s32.totalorder %s16, 1
    %p34 = por %p32, %p33
    %p35 = scmp.ne.s32.totalorder %s24, %s25
    %p36 = scmp.eq.s32.totalorder %s16, 0
    %p37 = por %p35, %p36
    %p38 = scmp.ne.s32.totalorder %s24, %s25
    %p39 = scmp.eq.s32.totalorder %s17, 1
    %p40 = por %p38, %p39
    %p42 = scmp.ne.s32.totalorder %s25, %s41
    %p43 = scmp.eq.s32.totalorder %s17, 0
    %p44 = por %p42, %p43
    %s46 = sadd.s32 %s45, 1
    %p49 = scmp.eq.s32.totalorder %s11, 1
    %p50 = scmp.ne.s32.totalorder %s45, %s47
    %p51 = scmp.eq.s32.totalorder %s11, 0
    %p52 = por %p50, %p51
    %p53 = scmp.ne.s32.totalorder %s45, %s47
    %p54 = scmp.eq.s32.totalorder %s16, 1
    %p55 = por %p53, %p54
    %p56 = scmp.ne.s32.totalorder %s47, %s48
    %p57 = scmp.eq.s32.totalorder %s16, 0
    %p58 = por %p56, %p57
    %p59 = scmp.ne.s32.totalorder %s47, %s48
    %p60 = scmp.eq.s32.totalorder %s17, 1
    %p61 = por %p59, %p60
    %p63 = scmp.ne.s32.totalorder %s48, %s62
    %p64 = scmp.eq.s32.totalorder %s17, 0
    %p65 = por %p63, %p64
    %s67 = sadd.s32 %s66, 1
    %p70 = scmp.eq.s32.totalorder %s11, 1
    %p71 = scmp.ne.s32.totalorder %s66, %s68
    %p72 = scmp.eq.s32.totalorder %s11, 0
    %p73 = por %p71, %p72
    %p74 = scmp.ne.s32.totalorder %s66, %s68
    %p75 = scmp.eq.s32.totalorder %s16, 1
    %p76 = por %p74, %p75
    %p77 = scmp.ne.s32.totalorder %s68, %s69
    %p78 = scmp.eq.s32.totalorder %s16, 0
    %p79 = por %p77, %p78
    %p80 = scmp.ne.s32.totalorder %s68, %s69
    %p81 = scmp.eq.s32.totalorder %s17, 1
    %p82 = por %p80, %p81
    %p84 = scmp.ne.s32.totalorder %s69, %s83
    %p85 = scmp.eq.s32.totalorder %s17, 0
    %p86 = por %p84, %p85
    %s88 = sadd.s32 %s87, 1
    %p91 = scmp.eq.s32.totalorder %s11, 1
    %p92 = scmp.ne.s32.totalorder %s87, %s89
    %p93 = scmp.eq.s32.totalorder %s11, 0
    %p94 = por %p92, %p93
    %p95 = scmp.ne.s32.totalorder %s87, %s89
    %p96 = scmp.eq.s32.totalorder %s16, 1
    %p97 = por %p95, %p96
    %p98 = scmp.ne.s32.totalorder %s89, %s90
    %p99 = scmp.eq.s32.totalorder %s16, 0
    %p100 = por %p98, %p99
    %p101 = scmp.ne.s32.totalorder %s89, %s90
    %p102 = scmp.eq.s32.totalorder %s17, 1
    %p103 = por %p101, %p102
    %p105 = scmp.ne.s32.totalorder %s90, %s104
    %p106 = scmp.eq.s32.totalorder %s17, 0
    %p107 = por %p105, %p106
    %s109 = sadd.s32 %s108, 1
    %p112 = scmp.eq.s32.totalorder %s11, 1
    %p113 = scmp.ne.s32.totalorder %s108, %s110
    %p114 = scmp.eq.s32.totalorder %s11, 0
    %p115 = por %p113, %p114
    %p116 = scmp.ne.s32.totalorder %s108, %s110
    %p117 = scmp.eq.s32.totalorder %s16, 1
    %p118 = por %p116, %p117
    %p119 = scmp.ne.s32.totalorder %s110, %s111
    %p120 = scmp.eq.s32.totalorder %s16, 0
    %p121 = por %p119, %p120
    %p122 = scmp.ne.s32.totalorder %s110, %s111
    %p123 = scmp.eq.s32.totalorder %s17, 1
    %p124 = por %p122, %p123
    %p126 = scmp.ne.s32.totalorder %s111, %s125
    %p127 = scmp.eq.s32.totalorder %s17, 0
    %p128 = por %p126, %p127
    %s129 = ssub.s32 %s11, %s18
    %p130 = scmp.eq.s32.totalorder %s129, 0
    %s132 = sadd.s32 %s131, 1
    %s133 = scalar_select %p130, %s131, %s132
    %p136 = pneg %p130
    %p137 = scmp.eq.s32.totalorder %s11, 1
    %p138 = por %p136, %p137
    %p139 = scmp.ne.s32.totalorder %s131, %s134
    %p140 = scmp.eq.s32.totalorder %s11, 0
    %p141 = por %p139, %p140
    %p142 = scmp.ne.s32.totalorder %s131, %s134
    %p143 = scmp.eq.s32.totalorder %s16, 1
    %p144 = por %p142, %p143
    %p145 = scmp.ne.s32.totalorder %s134, %s135
    %p146 = scmp.eq.s32.totalorder %s16, 0
    %p147 = por %p145, %p146
    %p148 = scmp.ne.s32.totalorder %s134, %s135
    %p149 = scmp.eq.s32.totalorder %s17, 1
    %p150 = por %p148, %p149
    %p152 = scmp.ne.s32.totalorder %s135, %s151
    %p153 = scmp.eq.s32.totalorder %s17, 0
    %p154 = por %p152, %p153
    %p155 = scmp.le.s32.totalorder 1, %s11
    %p156 = scmp.lt.s32.totalorder %s11, 3
    %p157 = pnand %p155, %p156
    %p158 = pneg %p157
    // Predicated region
    $region9: #{_forward.1} parent=5 // pred_check
      _
    $region10: #{_forward.1} parent=5 // pred_check_branch
      %160 = sbr.rel (%p157) target = $region12
    $region11: #{_forward.1} parent=5 // pred_region
      %s161 = ssub.s32 %s11, 1
      // Predicated region
      $region13: #{_forward.1} parent=11 // pred_check
        %p162 = pneg %p58
      $region14: #{_forward.1} parent=11 // pred_check_branch
        %164 = sbr.rel (%p162) target = $region16
      $region15: #{_forward.1} parent=11 // pred_region
        _
      $region16: #{_forward.1} parent=11 // pred_fallthru
        _
      // Predicated region
      $region17: #{_forward.1} parent=11 // pred_check
        %p165 = pneg %p79
      $region18: #{_forward.1} parent=11 // pred_check_branch
        %167 = sbr.rel (%p165) target = $region20
      $region19: #{_forward.1} parent=11 // pred_region
        _
      $region20: #{_forward.1} parent=11 // pred_fallthru
        _
      // Predicated region
      $region21: #{_forward.1} parent=11 // pred_check
        %p168 = pneg %p100
      $region22: #{_forward.1} parent=11 // pred_check_branch
        %170 = sbr.rel (%p168) target = $region24
      $region23: #{_forward.1} parent=11 // pred_region
        _
      $region24: #{_forward.1} parent=11 // pred_fallthru
        _
      // Predicated region
      $region25: #{_forward.1} parent=11 // pred_check
        %p171 = pneg %p121
      $region26: #{_forward.1} parent=11 // pred_check_branch
        %173 = sbr.rel (%p171) target = $region28
      $region27: #{_forward.1} parent=11 // pred_region
        _
      $region28: #{_forward.1} parent=11 // pred_fallthru
        _
    $region12: #{_forward.1} parent=5 // pred_fallthru
      _
    %p174 = scmp.lt.s32.totalorder %s11, 2
    // Predicated region
    $region29: #{_forward.1} parent=5 // pred_check
      %p175 = pneg %p174
    $region30: #{_forward.1} parent=5 // pred_check_branch
      %177 = sbr.rel (%p175) target = $region32
    $region31: #{_forward.1} parent=5 // pred_region
      // Predicated region
      $region33: #{_forward.1} parent=31 // pred_check
        %p178 = pneg %p31
      $region34: #{_forward.1} parent=31 // pred_check_branch
        %180 = sbr.rel (%p178) target = $region36
      $region35: #{_forward.1} parent=31 // pred_region
        %s181 = smul.u32 16, %s11
        %p182 = scmp.lt.s32.totalorder %s181, 31
        %s183 = scalar_select %p182, %s181, 31
        %s184 = smul.addr %s183, 8
        %s185 = scalar_lea.vmem %s0, %s184
        %s186 = smul.u32 16, %s11
      $region36: #{_forward.1} parent=31 // pred_fallthru
        _
    $region32: #{_forward.1} parent=5 // pred_fallthru
      _
    %p187 = scmp.le.s32.totalorder 1, %s11
    %p188 = scmp.lt.s32.totalorder %s11, 3
    %p189 = pnand %p187, %p188
    %p190 = pneg %p189
    // Predicated region
    $region37: #{_forward.1} parent=5 // pred_check
      _
    $region38: #{_forward.1} parent=5 // pred_check_branch
      %192 = sbr.rel (%p189) target = $region40
    $region39: #{_forward.1} parent=5 // pred_region
      %s193 = ssub.s32 %s11, 1
      %s194 = smul.u32 16, %s16
      %p195 = scmp.lt.s32.totalorder %s194, 31
      %s196 = scalar_select %p195, %s194, 31
      %s197 = smul.addr %s196, 8
      %s198 = scalar_lea.vmem %s0, %s197
      %p199 = pneg %p37
      %p200 = pneg %p34
      %p201 = pneg %p58
      %p202 = pneg %p55
      %p203 = pneg %p79
      %p204 = pneg %p76
      %p205 = pneg %p100
      %p206 = pneg %p97
      %p207 = pneg %p121
      %p208 = pneg %p118
      %p209 = pneg %p147
      %p210 = pneg %p144
      %s211 = smul.u32 16, %s16
      %p212 = scmp.lt.s32.totalorder %s211, 31
      %s213 = scalar_select %p212, %s211, 31
      %s214 = smul.addr %s213, 4
      %s215 = scalar_lea.vmem %s5, %s214
      %s216 = smul.u32 16, %s16
      %p217 = scmp.lt.s32.totalorder %s216, 31
      %s218 = scalar_select %p217, %s216, 31
      %s219 = smul.addr %s218, 8
      %s220 = scalar_lea.vmem %s0, %s219
      %s221 = smul.u32 16, %s16
      %s222 = smul.u32 16, %s16
      %p223 = scmp.lt.s32.totalorder %s222, 31
      %s224 = scalar_select %p223, %s222, 31
      %s225 = smul.addr %s224, 4
      %s226 = scalar_lea.vmem %s5, %s225
      %s227 = smul.u32 16, %s16
      %v229 = vld [vmem:[%s220] sm:$0xff]
      %v230 = vld [vmem:[%s220 + $0x8] sm:$0xff]
      %v231 = vld [vmem:[%s220 + $0x10] sm:$0xff]
      %v232 = vld [vmem:[%s220 + $0x18] sm:$0xff]
      %v233 = vld [vmem:[%s220 + $0x20] sm:$0xff]
      %v234 = vld [vmem:[%s220 + $0x28] sm:$0xff]
      %v235 = vld [vmem:[%s220 + $0x30] sm:$0xff]
      %v236 = vld [vmem:[%s220 + $0x38] sm:$0xff]
      %v237 = vld [vmem:[%s220 + $0x40] sm:$0xff]
      %v238 = vld [vmem:[%s220 + $0x48] sm:$0xff]
      %v239 = vld [vmem:[%s220 + $0x50] sm:$0xff]
      %v240 = vld [vmem:[%s220 + $0x58] sm:$0xff]
      %v241 = vld [vmem:[%s220 + $0x60] sm:$0xff]
      %v242 = vld [vmem:[%s220 + $0x68] sm:$0xff]
      %v243 = vld [vmem:[%s220 + $0x70] sm:$0xff]
      %v244 = vld [vmem:[%s220 + $0x78] sm:$0xff]
      %v245 = vpack.c.bf16 %v230, %v229
      %v246 = vpack.c.bf16 %v232, %v231
      %v247 = vpack.c.bf16 %v234, %v233
      %v248 = vpack.c.bf16 %v236, %v235
      %v249 = vpack.c.bf16 %v238, %v237
      %v250 = vpack.c.bf16 %v240, %v239
      %v251 = vpack.c.bf16 %v242, %v241
      %v252 = vpack.c.bf16 %v244, %v243
      %v253 = vld [vmem:[%s1] sm:$0xf]
      %v254 = vld [vmem:[%s1 + $0x4] sm:$0xf]
      %v255 = vld [vmem:[%s1 + $0x8] sm:$0xf]
      %v256 = vld [vmem:[%s1 + $0xc] sm:$0xf]
      %v257 = vld [vmem:[%s1 + $0x10] sm:$0xf]
      %v258 = vld [vmem:[%s1 + $0x14] sm:$0xf]
      %v259 = vld [vmem:[%s1 + $0x18] sm:$0xf]
      %v260 = vld [vmem:[%s1 + $0x1c] sm:$0xf]
      %v261 = vld [vmem:[%s1 + $0x20] sm:$0xf]
      %v262 = vld [vmem:[%s1 + $0x24] sm:$0xf]
      %v263 = vld [vmem:[%s1 + $0x28] sm:$0xf]
      %v264 = vld [vmem:[%s1 + $0x2c] sm:$0xf]
      %v265 = vld [vmem:[%s1 + $0x30] sm:$0xf]
      %v266 = vld [vmem:[%s1 + $0x34] sm:$0xf]
      %v267 = vld [vmem:[%s1 + $0x38] sm:$0xf]
      %v268 = vld [vmem:[%s1 + $0x3c] sm:$0xf]
      %v285 = vunpack.c.l.b16 %v253
      %v286 = vunpack.c.l.b16 %v254
      %v287 = vunpack.c.l.b16 %v255
      %v288 = vunpack.c.l.b16 %v256
      %v289 = vunpack.c.l.b16 %v257
      %v290 = vunpack.c.l.b16 %v258
      %v291 = vunpack.c.l.b16 %v259
      %v292 = vunpack.c.l.b16 %v260
      %v293 = vunpack.c.l.b16 %v261
      %v294 = vunpack.c.l.b16 %v262
      %v295 = vunpack.c.l.b16 %v263
      %v296 = vunpack.c.l.b16 %v264
      %v297 = vunpack.c.l.b16 %v265
      %v298 = vunpack.c.l.b16 %v266
      %v299 = vunpack.c.l.b16 %v267
      %v300 = vunpack.c.l.b16 %v268
      %v301 = vpack.c.b16 %v286, %v285
      %v302 = vpack.c.b16 %v288, %v287
      %v303 = vpack.c.b16 %v290, %v289
      %v304 = vpack.c.b16 %v292, %v291
      %v305 = vpack.c.b16 %v294, %v293
      %v306 = vpack.c.b16 %v296, %v295
      %v307 = vpack.c.b16 %v298, %v297
      %v308 = vpack.c.b16 %v300, %v299
      %317 = vmatprep.subr.bf16.mxu0 0
      %318 = vmatpush1.bf16.msra.mxu0 %v308
      %319 = vmatprep.subr.bf16.mxu0 0
      %320 = vmatpush1.bf16.msra.mxu0 %v307
      %321 = vmatprep.subr.bf16.mxu0 0
      %322 = vmatpush1.bf16.msra.mxu0 %v306
      %323 = vmatprep.subr.bf16.mxu0 0
      %324 = vmatpush1.bf16.msra.mxu0 %v305
      %325 = vmatprep.subr.bf16.mxu0 0
      %326 = vmatpush1.bf16.msra.mxu0 %v304
      %327 = vmatprep.subr.bf16.mxu0 0
      %328 = vmatpush1.bf16.msra.mxu0 %v303
      %329 = vmatprep.subr.bf16.mxu0 0
      %330 = vmatpush1.bf16.msra.mxu0 %v302
      %331 = vmatprep.subr.bf16.mxu0 0
      %332 = vmatpush1.bf16.msra.mxu0 %v301
      %333 = vmatprep.subr.bf16.mxu0 0
      %334 = vmatpush2.bf16.msra.mxu0 0
      %335 = vmatprep.subr.bf16.mxu0 0
      %336 = vmatpush2.bf16.msra.mxu0 0
      %337 = vmatprep.subr.bf16.mxu0 0
      %338 = vmatpush2.bf16.msra.mxu0 0
      %339 = vmatprep.subr.bf16.mxu0 0
      %340 = vmatpush2.bf16.msra.mxu0 0
      %341 = vmatprep.subr.bf16.mxu0 0
      %342 = vmatpush2.bf16.msra.mxu0 0
      %343 = vmatprep.subr.bf16.mxu0 0
      %344 = vmatpush2.bf16.msra.mxu0 0
      %345 = vmatprep.subr.bf16.mxu0 0
      %346 = vmatpush2.bf16.msra.mxu0 0
      %347 = vmatprep.subr.bf16.mxu0 0
      %348 = vmatpush2.bf16.msra.mxu0 0
      %349 = vmatprep.mubr.bf16.mxu0 0
      %350 = vmatmul.mubr.bf16.gmra.mxu0 %v245
      %v351 = vpop.f32.mrf.mxu0
      %v352 = vadd.f32 0.0, %v351
      %v353 = vpop.f32.mrf.mxu0
      %v354 = vpop.f32.mrf.mxu0
      %v355 = vadd.f32 0.0, %v354
      %v356 = vpop.f32.mrf.mxu0
      %357 = vmatprep.mubr.bf16.mxu0 0
      %358 = vmatmul.mubr.bf16.gmra.mxu0 %v246
      %v359 = vpop.f32.mrf.mxu0
      %v360 = vadd.f32 0.0, %v359
      %v361 = vpop.f32.mrf.mxu0
      %v362 = vpop.f32.mrf.mxu0
      %v363 = vadd.f32 0.0, %v362
      %v364 = vpop.f32.mrf.mxu0
      %365 = vmatprep.mubr.bf16.mxu0 0
      %366 = vmatmul.mubr.bf16.gmra.mxu0 %v247
      %v367 = vpop.f32.mrf.mxu0
      %v368 = vadd.f32 0.0, %v367
      %v369 = vpop.f32.mrf.mxu0
      %v370 = vpop.f32.mrf.mxu0
      %v371 = vadd.f32 0.0, %v370
      %v372 = vpop.f32.mrf.mxu0
      %373 = vmatprep.mubr.bf16.mxu0 0
      %374 = vmatmul.mubr.bf16.gmra.mxu0 %v248
      %v375 = vpop.f32.mrf.mxu0
      %v376 = vadd.f32 0.0, %v375
      %v377 = vpop.f32.mrf.mxu0
      %v378 = vpop.f32.mrf.mxu0
      %v379 = vadd.f32 0.0, %v378
      %v380 = vpop.f32.mrf.mxu0
      %381 = vmatprep.mubr.bf16.mxu0 0
      %382 = vmatmul.mubr.bf16.gmra.mxu0 %v249
      %v383 = vpop.f32.mrf.mxu0
      %v384 = vadd.f32 0.0, %v383
      %v385 = vpop.f32.mrf.mxu0
      %v386 = vpop.f32.mrf.mxu0
      %v387 = vadd.f32 0.0, %v386
      %v388 = vpop.f32.mrf.mxu0
      %389 = vmatprep.mubr.bf16.mxu0 0
      %390 = vmatmul.mubr.bf16.gmra.mxu0 %v250
      %v391 = vpop.f32.mrf.mxu0
      %v392 = vadd.f32 0.0, %v391
      %v393 = vpop.f32.mrf.mxu0
      %v394 = vpop.f32.mrf.mxu0
      %v395 = vadd.f32 0.0, %v394
      %v396 = vpop.f32.mrf.mxu0
      %397 = vmatprep.mubr.bf16.mxu0 0
      %398 = vmatmul.mubr.bf16.gmra.mxu0 %v251
      %v399 = vpop.f32.mrf.mxu0
      %v400 = vadd.f32 0.0, %v399
      %v401 = vpop.f32.mrf.mxu0
      %v402 = vpop.f32.mrf.mxu0
      %v403 = vadd.f32 0.0, %v402
      %v404 = vpop.f32.mrf.mxu0
      %405 = vmatprep.mubr.bf16.mxu0 0
      %406 = vmatmul.mubr.bf16.gmra.mxu0 %v252
      %v407 = vpop.f32.mrf.mxu0
      %v408 = vadd.f32 0.0, %v407
      %v409 = vpop.f32.mrf.mxu0
      %v410 = vpop.f32.mrf.mxu0
      %v411 = vadd.f32 0.0, %v410
      %v412 = vpop.f32.mrf.mxu0
      %413 = vdwg.mxu0
      %v414 = vmax.f32 %v352, 0.0
      %v415 = vmax.f32 %v355, 0.0
      %v416 = vmax.f32 %v360, 0.0
      %v417 = vmax.f32 %v363, 0.0
      %v418 = vmax.f32 %v368, 0.0
      %v419 = vmax.f32 %v371, 0.0
      %v420 = vmax.f32 %v376, 0.0
      %v421 = vmax.f32 %v379, 0.0
      %v422 = vmax.f32 %v384, 0.0
      %v423 = vmax.f32 %v387, 0.0
      %v424 = vmax.f32 %v392, 0.0
      %v425 = vmax.f32 %v395, 0.0
      %v426 = vmax.f32 %v400, 0.0
      %v427 = vmax.f32 %v403, 0.0
      %v428 = vmax.f32 %v408, 0.0
      %v429 = vmax.f32 %v411, 0.0
      %v430 = vpack.c.bf16 %v415, %v414
      %v431 = vpack.c.bf16 %v417, %v416
      %v432 = vpack.c.bf16 %v419, %v418
      %v433 = vpack.c.bf16 %v421, %v420
      %v434 = vpack.c.bf16 %v423, %v422
      %v435 = vpack.c.bf16 %v425, %v424
      %v436 = vpack.c.bf16 %v427, %v426
      %v437 = vpack.c.bf16 %v429, %v428
      %v438 = vld [vmem:[%s2] sm:$0xf]
      %v439 = vld [vmem:[%s2 + $0x4] sm:$0xf]
      %v440 = vld [vmem:[%s2 + $0x8] sm:$0xf]
      %v441 = vld [vmem:[%s2 + $0xc] sm:$0xf]
      %v442 = vld [vmem:[%s2 + $0x10] sm:$0xf]
      %v443 = vld [vmem:[%s2 + $0x14] sm:$0xf]
      %v444 = vld [vmem:[%s2 + $0x18] sm:$0xf]
      %v445 = vld [vmem:[%s2 + $0x1c] sm:$0xf]
      %v446 = vld [vmem:[%s2 + $0x20] sm:$0xf]
      %v447 = vld [vmem:[%s2 + $0x24] sm:$0xf]
      %v448 = vld [vmem:[%s2 + $0x28] sm:$0xf]
      %v449 = vld [vmem:[%s2 + $0x2c] sm:$0xf]
      %v450 = vld [vmem:[%s2 + $0x30] sm:$0xf]
      %v451 = vld [vmem:[%s2 + $0x34] sm:$0xf]
      %v452 = vld [vmem:[%s2 + $0x38] sm:$0xf]
      %v453 = vld [vmem:[%s2 + $0x3c] sm:$0xf]
      %v470 = vunpack.c.l.b16 %v438
      %v471 = vunpack.c.l.b16 %v439
      %v472 = vunpack.c.l.b16 %v440
      %v473 = vunpack.c.l.b16 %v441
      %v474 = vunpack.c.l.b16 %v442
      %v475 = vunpack.c.l.b16 %v443
      %v476 = vunpack.c.l.b16 %v444
      %v477 = vunpack.c.l.b16 %v445
      %v478 = vunpack.c.l.b16 %v446
      %v479 = vunpack.c.l.b16 %v447
      %v480 = vunpack.c.l.b16 %v448
      %v481 = vunpack.c.l.b16 %v449
      %v482 = vunpack.c.l.b16 %v450
      %v483 = vunpack.c.l.b16 %v451
      %v484 = vunpack.c.l.b16 %v452
      %v485 = vunpack.c.l.b16 %v453
      %v486 = vpack.c.b16 %v471, %v470
      %v487 = vpack.c.b16 %v473, %v472
      %v488 = vpack.c.b16 %v475, %v474
      %v489 = vpack.c.b16 %v477, %v476
      %v490 = vpack.c.b16 %v479, %v478
      %v491 = vpack.c.b16 %v481, %v480
      %v492 = vpack.c.b16 %v483, %v482
      %v493 = vpack.c.b16 %v485, %v484
      %502 = vmatprep.subr.bf16.mxu0 0
      %503 = vmatpush1.bf16.msra.mxu0 %v493
      %504 = vmatprep.subr.bf16.mxu0 0
      %505 = vmatpush1.bf16.msra.mxu0 %v492
      %506 = vmatprep.subr.bf16.mxu0 0
      %507 = vmatpush1.bf16.msra.mxu0 %v491
      %508 = vmatprep.subr.bf16.mxu0 0
      %509 = vmatpush1.bf16.msra.mxu0 %v490
      %510 = vmatprep.subr.bf16.mxu0 0
      %511 = vmatpush1.bf16.msra.mxu0 %v489
      %512 = vmatprep.subr.bf16.mxu0 0
      %513 = vmatpush1.bf16.msra.mxu0 %v488
      %514 = vmatprep.subr.bf16.mxu0 0
      %515 = vmatpush1.bf16.msra.mxu0 %v487
      %516 = vmatprep.subr.bf16.mxu0 0
      %517 = vmatpush1.bf16.msra.mxu0 %v486
      %518 = vmatprep.subr.bf16.mxu0 0
      %519 = vmatpush2.bf16.msra.mxu0 0
      %520 = vmatprep.subr.bf16.mxu0 0
      %521 = vmatpush2.bf16.msra.mxu0 0
      %522 = vmatprep.subr.bf16.mxu0 0
      %523 = vmatpush2.bf16.msra.mxu0 0
      %524 = vmatprep.subr.bf16.mxu0 0
      %525 = vmatpush2.bf16.msra.mxu0 0
      %526 = vmatprep.subr.bf16.mxu0 0
      %527 = vmatpush2.bf16.msra.mxu0 0
      %528 = vmatprep.subr.bf16.mxu0 0
      %529 = vmatpush2.bf16.msra.mxu0 0
      %530 = vmatprep.subr.bf16.mxu0 0
      %531 = vmatpush2.bf16.msra.mxu0 0
      %532 = vmatprep.subr.bf16.mxu0 0
      %533 = vmatpush2.bf16.msra.mxu0 0
      %534 = vmatprep.mubr.bf16.mxu0 0
      %535 = vmatmul.mubr.bf16.gmra.mxu0 %v430
      %v536 = vpop.f32.mrf.mxu0
      %v537 = vadd.f32 0.0, %v536
      %v538 = vpop.f32.mrf.mxu0
      %v539 = vpop.f32.mrf.mxu0
      %v540 = vadd.f32 0.0, %v539
      %v541 = vpop.f32.mrf.mxu0
      %542 = vmatprep.mubr.bf16.mxu0 0
      %543 = vmatmul.mubr.bf16.gmra.mxu0 %v431
      %v544 = vpop.f32.mrf.mxu0
      %v545 = vadd.f32 0.0, %v544
      %v546 = vpop.f32.mrf.mxu0
      %v547 = vpop.f32.mrf.mxu0
      %v548 = vadd.f32 0.0, %v547
      %v549 = vpop.f32.mrf.mxu0
      %550 = vmatprep.mubr.bf16.mxu0 0
      %551 = vmatmul.mubr.bf16.gmra.mxu0 %v432
      %v552 = vpop.f32.mrf.mxu0
      %v553 = vadd.f32 0.0, %v552
      %v554 = vpop.f32.mrf.mxu0
      %v555 = vpop.f32.mrf.mxu0
      %v556 = vadd.f32 0.0, %v555
      %v557 = vpop.f32.mrf.mxu0
      %558 = vmatprep.mubr.bf16.mxu0 0
      %559 = vmatmul.mubr.bf16.gmra.mxu0 %v433
      %v560 = vpop.f32.mrf.mxu0
      %v561 = vadd.f32 0.0, %v560
      %v562 = vpop.f32.mrf.mxu0
      %v563 = vpop.f32.mrf.mxu0
      %v564 = vadd.f32 0.0, %v563
      %v565 = vpop.f32.mrf.mxu0
      %566 = vmatprep.mubr.bf16.mxu0 0
      %567 = vmatmul.mubr.bf16.gmra.mxu0 %v434
      %v568 = vpop.f32.mrf.mxu0
      %v569 = vadd.f32 0.0, %v568
      %v570 = vpop.f32.mrf.mxu0
      %v571 = vpop.f32.mrf.mxu0
      %v572 = vadd.f32 0.0, %v571
      %v573 = vpop.f32.mrf.mxu0
      %574 = vmatprep.mubr.bf16.mxu0 0
      %575 = vmatmul.mubr.bf16.gmra.mxu0 %v435
      %v576 = vpop.f32.mrf.mxu0
      %v577 = vadd.f32 0.0, %v576
      %v578 = vpop.f32.mrf.mxu0
      %v579 = vpop.f32.mrf.mxu0
      %v580 = vadd.f32 0.0, %v579
      %v581 = vpop.f32.mrf.mxu0
      %582 = vmatprep.mubr.bf16.mxu0 0
      %583 = vmatmul.mubr.bf16.gmra.mxu0 %v436
      %v584 = vpop.f32.mrf.mxu0
      %v585 = vadd.f32 0.0, %v584
      %v586 = vpop.f32.mrf.mxu0
      %v587 = vpop.f32.mrf.mxu0
      %v588 = vadd.f32 0.0, %v587
      %v589 = vpop.f32.mrf.mxu0
      %590 = vmatprep.mubr.bf16.mxu0 0
      %591 = vmatmul.mubr.bf16.gmra.mxu0 %v437
      %v592 = vpop.f32.mrf.mxu0
      %v593 = vadd.f32 0.0, %v592
      %v594 = vpop.f32.mrf.mxu0
      %v595 = vpop.f32.mrf.mxu0
      %v596 = vadd.f32 0.0, %v595
      %v597 = vpop.f32.mrf.mxu0
      %598 = vdwg.mxu0
      %v599 = vmax.f32 %v537, 0.0
      %v600 = vmax.f32 %v540, 0.0
      %v601 = vmax.f32 %v545, 0.0
      %v602 = vmax.f32 %v548, 0.0
      %v603 = vmax.f32 %v553, 0.0
      %v604 = vmax.f32 %v556, 0.0
      %v605 = vmax.f32 %v561, 0.0
      %v606 = vmax.f32 %v564, 0.0
      %v607 = vmax.f32 %v569, 0.0
      %v608 = vmax.f32 %v572, 0.0
      %v609 = vmax.f32 %v577, 0.0
      %v610 = vmax.f32 %v580, 0.0
      %v611 = vmax.f32 %v585, 0.0
      %v612 = vmax.f32 %v588, 0.0
      %v613 = vmax.f32 %v593, 0.0
      %v614 = vmax.f32 %v596, 0.0
      %v615 = vpack.c.bf16 %v600, %v599
      %v616 = vpack.c.bf16 %v602, %v601
      %v617 = vpack.c.bf16 %v604, %v603
      %v618 = vpack.c.bf16 %v606, %v605
      %v619 = vpack.c.bf16 %v608, %v607
      %v620 = vpack.c.bf16 %v610, %v609
      %v621 = vpack.c.bf16 %v612, %v611
      %v622 = vpack.c.bf16 %v614, %v613
      %v623 = vld [vmem:[%s3] sm:$0xf]
      %v624 = vld [vmem:[%s3 + $0x4] sm:$0xf]
      %v625 = vld [vmem:[%s3 + $0x8] sm:$0xf]
      %v626 = vld [vmem:[%s3 + $0xc] sm:$0xf]
      %v627 = vld [vmem:[%s3 + $0x10] sm:$0xf]
      %v628 = vld [vmem:[%s3 + $0x14] sm:$0xf]
      %v629 = vld [vmem:[%s3 + $0x18] sm:$0xf]
      %v630 = vld [vmem:[%s3 + $0x1c] sm:$0xf]
      %v631 = vld [vmem:[%s3 + $0x20] sm:$0xf]
      %v632 = vld [vmem:[%s3 + $0x24] sm:$0xf]
      %v633 = vld [vmem:[%s3 + $0x28] sm:$0xf]
      %v634 = vld [vmem:[%s3 + $0x2c] sm:$0xf]
      %v635 = vld [vmem:[%s3 + $0x30] sm:$0xf]
      %v636 = vld [vmem:[%s3 + $0x34] sm:$0xf]
      %v637 = vld [vmem:[%s3 + $0x38] sm:$0xf]
      %v638 = vld [vmem:[%s3 + $0x3c] sm:$0xf]
      %v655 = vunpack.c.l.b16 %v623
      %v656 = vunpack.c.l.b16 %v624
      %v657 = vunpack.c.l.b16 %v625
      %v658 = vunpack.c.l.b16 %v626
      %v659 = vunpack.c.l.b16 %v627
      %v660 = vunpack.c.l.b16 %v628
      %v661 = vunpack.c.l.b16 %v629
      %v662 = vunpack.c.l.b16 %v630
      %v663 = vunpack.c.l.b16 %v631
      %v664 = vunpack.c.l.b16 %v632
      %v665 = vunpack.c.l.b16 %v633
      %v666 = vunpack.c.l.b16 %v634
      %v667 = vunpack.c.l.b16 %v635
      %v668 = vunpack.c.l.b16 %v636
      %v669 = vunpack.c.l.b16 %v637
      %v670 = vunpack.c.l.b16 %v638
      %v671 = vpack.c.b16 %v656, %v655
      %v672 = vpack.c.b16 %v658, %v657
      %v673 = vpack.c.b16 %v660, %v659
      %v674 = vpack.c.b16 %v662, %v661
      %v675 = vpack.c.b16 %v664, %v663
      %v676 = vpack.c.b16 %v666, %v665
      %v677 = vpack.c.b16 %v668, %v667
      %v678 = vpack.c.b16 %v670, %v669
      %687 = vmatprep.subr.bf16.mxu0 0
      %688 = vmatpush1.bf16.msra.mxu0 %v678
      %689 = vmatprep.subr.bf16.mxu0 0
      %690 = vmatpush1.bf16.msra.mxu0 %v677
      %691 = vmatprep.subr.bf16.mxu0 0
      %692 = vmatpush1.bf16.msra.mxu0 %v676
      %693 = vmatprep.subr.bf16.mxu0 0
      %694 = vmatpush1.bf16.msra.mxu0 %v675
      %695 = vmatprep.subr.bf16.mxu0 0
      %696 = vmatpush1.bf16.msra.mxu0 %v674
      %697 = vmatprep.subr.bf16.mxu0 0
      %698 = vmatpush1.bf16.msra.mxu0 %v673
      %699 = vmatprep.subr.bf16.mxu0 0
      %700 = vmatpush1.bf16.msra.mxu0 %v672
      %701 = vmatprep.subr.bf16.mxu0 0
      %702 = vmatpush1.bf16.msra.mxu0 %v671
      %703 = vmatprep.subr.bf16.mxu0 0
      %704 = vmatpush2.bf16.msra.mxu0 0
      %705 = vmatprep.subr.bf16.mxu0 0
      %706 = vmatpush2.bf16.msra.mxu0 0
      %707 = vmatprep.subr.bf16.mxu0 0
      %708 = vmatpush2.bf16.msra.mxu0 0
      %709 = vmatprep.subr.bf16.mxu0 0
      %710 = vmatpush2.bf16.msra.mxu0 0
      %711 = vmatprep.subr.bf16.mxu0 0
      %712 = vmatpush2.bf16.msra.mxu0 0
      %713 = vmatprep.subr.bf16.mxu0 0
      %714 = vmatpush2.bf16.msra.mxu0 0
      %715 = vmatprep.subr.bf16.mxu0 0
      %716 = vmatpush2.bf16.msra.mxu0 0
      %717 = vmatprep.subr.bf16.mxu0 0
      %718 = vmatpush2.bf16.msra.mxu0 0
      %719 = vmatprep.mubr.bf16.mxu0 0
      %720 = vmatmul.mubr.bf16.gmra.mxu0 %v615
      %v721 = vpop.f32.mrf.mxu0
      %v722 = vadd.f32 0.0, %v721
      %v723 = vpop.f32.mrf.mxu0
      %v724 = vpop.f32.mrf.mxu0
      %v725 = vadd.f32 0.0, %v724
      %v726 = vpop.f32.mrf.mxu0
      %727 = vmatprep.mubr.bf16.mxu0 0
      %728 = vmatmul.mubr.bf16.gmra.mxu0 %v616
      %v729 = vpop.f32.mrf.mxu0
      %v730 = vadd.f32 0.0, %v729
      %v731 = vpop.f32.mrf.mxu0
      %v732 = vpop.f32.mrf.mxu0
      %v733 = vadd.f32 0.0, %v732
      %v734 = vpop.f32.mrf.mxu0
      %735 = vmatprep.mubr.bf16.mxu0 0
      %736 = vmatmul.mubr.bf16.gmra.mxu0 %v617
      %v737 = vpop.f32.mrf.mxu0
      %v738 = vadd.f32 0.0, %v737
      %v739 = vpop.f32.mrf.mxu0
      %v740 = vpop.f32.mrf.mxu0
      %v741 = vadd.f32 0.0, %v740
      %v742 = vpop.f32.mrf.mxu0
      %743 = vmatprep.mubr.bf16.mxu0 0
      %744 = vmatmul.mubr.bf16.gmra.mxu0 %v618
      %v745 = vpop.f32.mrf.mxu0
      %v746 = vadd.f32 0.0, %v745
      %v747 = vpop.f32.mrf.mxu0
      %v748 = vpop.f32.mrf.mxu0
      %v749 = vadd.f32 0.0, %v748
      %v750 = vpop.f32.mrf.mxu0
      %751 = vmatprep.mubr.bf16.mxu0 0
      %752 = vmatmul.mubr.bf16.gmra.mxu0 %v619
      %v753 = vpop.f32.mrf.mxu0
      %v754 = vadd.f32 0.0, %v753
      %v755 = vpop.f32.mrf.mxu0
      %v756 = vpop.f32.mrf.mxu0
      %v757 = vadd.f32 0.0, %v756
      %v758 = vpop.f32.mrf.mxu0
      %759 = vmatprep.mubr.bf16.mxu0 0
      %760 = vmatmul.mubr.bf16.gmra.mxu0 %v620
      %v761 = vpop.f32.mrf.mxu0
      %v762 = vadd.f32 0.0, %v761
      %v763 = vpop.f32.mrf.mxu0
      %v764 = vpop.f32.mrf.mxu0
      %v765 = vadd.f32 0.0, %v764
      %v766 = vpop.f32.mrf.mxu0
      %767 = vmatprep.mubr.bf16.mxu0 0
      %768 = vmatmul.mubr.bf16.gmra.mxu0 %v621
      %v769 = vpop.f32.mrf.mxu0
      %v770 = vadd.f32 0.0, %v769
      %v771 = vpop.f32.mrf.mxu0
      %v772 = vpop.f32.mrf.mxu0
      %v773 = vadd.f32 0.0, %v772
      %v774 = vpop.f32.mrf.mxu0
      %775 = vmatprep.mubr.bf16.mxu0 0
      %776 = vmatmul.mubr.bf16.gmra.mxu0 %v622
      %v777 = vpop.f32.mrf.mxu0
      %v778 = vadd.f32 0.0, %v777
      %v779 = vpop.f32.mrf.mxu0
      %v780 = vpop.f32.mrf.mxu0
      %v781 = vadd.f32 0.0, %v780
      %v782 = vpop.f32.mrf.mxu0
      %783 = vdwg.mxu0
      %v784 = vmax.f32 %v722, 0.0
      %v785 = vmax.f32 %v725, 0.0
      %v786 = vmax.f32 %v730, 0.0
      %v787 = vmax.f32 %v733, 0.0
      %v788 = vmax.f32 %v738, 0.0
      %v789 = vmax.f32 %v741, 0.0
      %v790 = vmax.f32 %v746, 0.0
      %v791 = vmax.f32 %v749, 0.0
      %v792 = vmax.f32 %v754, 0.0
      %v793 = vmax.f32 %v757, 0.0
      %v794 = vmax.f32 %v762, 0.0
      %v795 = vmax.f32 %v765, 0.0
      %v796 = vmax.f32 %v770, 0.0
      %v797 = vmax.f32 %v773, 0.0
      %v798 = vmax.f32 %v778, 0.0
      %v799 = vmax.f32 %v781, 0.0
      %v800 = vpack.c.bf16 %v785, %v784
      %v801 = vpack.c.bf16 %v787, %v786
      %v802 = vpack.c.bf16 %v789, %v788
      %v803 = vpack.c.bf16 %v791, %v790
      %v804 = vpack.c.bf16 %v793, %v792
      %v805 = vpack.c.bf16 %v795, %v794
      %v806 = vpack.c.bf16 %v797, %v796
      %v807 = vpack.c.bf16 %v799, %v798
      %v808 = vld [vmem:[%s4] sm:$0xf]
      %v809 = vld [vmem:[%s4 + $0x4] sm:$0xf]
      %v810 = vld [vmem:[%s4 + $0x8] sm:$0xf]
      %v811 = vld [vmem:[%s4 + $0xc] sm:$0xf]
      %v812 = vld [vmem:[%s4 + $0x10] sm:$0xf]
      %v813 = vld [vmem:[%s4 + $0x14] sm:$0xf]
      %v814 = vld [vmem:[%s4 + $0x18] sm:$0xf]
      %v815 = vld [vmem:[%s4 + $0x1c] sm:$0xf]
      %v816 = vld [vmem:[%s4 + $0x20] sm:$0xf]
      %v817 = vld [vmem:[%s4 + $0x24] sm:$0xf]
      %v818 = vld [vmem:[%s4 + $0x28] sm:$0xf]
      %v819 = vld [vmem:[%s4 + $0x2c] sm:$0xf]
      %v820 = vld [vmem:[%s4 + $0x30] sm:$0xf]
      %v821 = vld [vmem:[%s4 + $0x34] sm:$0xf]
      %v822 = vld [vmem:[%s4 + $0x38] sm:$0xf]
      %v823 = vld [vmem:[%s4 + $0x3c] sm:$0xf]
      %v840 = vunpack.c.l.b16 %v808
      %v841 = vunpack.c.l.b16 %v809
      %v842 = vunpack.c.l.b16 %v810
      %v843 = vunpack.c.l.b16 %v811
      %v844 = vunpack.c.l.b16 %v812
      %v845 = vunpack.c.l.b16 %v813
      %v846 = vunpack.c.l.b16 %v814
      %v847 = vunpack.c.l.b16 %v815
      %v848 = vunpack.c.l.b16 %v816
      %v849 = vunpack.c.l.b16 %v817
      %v850 = vunpack.c.l.b16 %v818
      %v851 = vunpack.c.l.b16 %v819
      %v852 = vunpack.c.l.b16 %v820
      %v853 = vunpack.c.l.b16 %v821
      %v854 = vunpack.c.l.b16 %v822
      %v855 = vunpack.c.l.b16 %v823
      %v856 = vpack.c.b16 %v841, %v840
      %v857 = vpack.c.b16 %v843, %v842
      %v858 = vpack.c.b16 %v845, %v844
      %v859 = vpack.c.b16 %v847, %v846
      %v860 = vpack.c.b16 %v849, %v848
      %v861 = vpack.c.b16 %v851, %v850
      %v862 = vpack.c.b16 %v853, %v852
      %v863 = vpack.c.b16 %v855, %v854
      %872 = vmatprep.subr.bf16.mxu0 0
      %873 = vmatpush1.bf16.msra.mxu0 %v863
      %874 = vmatprep.subr.bf16.mxu0 0
      %875 = vmatpush1.bf16.msra.mxu0 %v862
      %876 = vmatprep.subr.bf16.mxu0 0
      %877 = vmatpush1.bf16.msra.mxu0 %v861
      %878 = vmatprep.subr.bf16.mxu0 0
      %879 = vmatpush1.bf16.msra.mxu0 %v860
      %880 = vmatprep.subr.bf16.mxu0 0
      %881 = vmatpush1.bf16.msra.mxu0 %v859
      %882 = vmatprep.subr.bf16.mxu0 0
      %883 = vmatpush1.bf16.msra.mxu0 %v858
      %884 = vmatprep.subr.bf16.mxu0 0
      %885 = vmatpush1.bf16.msra.mxu0 %v857
      %886 = vmatprep.subr.bf16.mxu0 0
      %887 = vmatpush1.bf16.msra.mxu0 %v856
      %888 = vmatprep.subr.bf16.mxu0 0
      %889 = vmatpush2.bf16.msra.mxu0 0
      %890 = vmatprep.subr.bf16.mxu0 0
      %891 = vmatpush2.bf16.msra.mxu0 0
      %892 = vmatprep.subr.bf16.mxu0 0
      %893 = vmatpush2.bf16.msra.mxu0 0
      %894 = vmatprep.subr.bf16.mxu0 0
      %895 = vmatpush2.bf16.msra.mxu0 0
      %896 = vmatprep.subr.bf16.mxu0 0
      %897 = vmatpush2.bf16.msra.mxu0 0
      %898 = vmatprep.subr.bf16.mxu0 0
      %899 = vmatpush2.bf16.msra.mxu0 0
      %900 = vmatprep.subr.bf16.mxu0 0
      %901 = vmatpush2.bf16.msra.mxu0 0
      %902 = vmatprep.subr.bf16.mxu0 0
      %903 = vmatpush2.bf16.msra.mxu0 0
      %904 = vmatprep.mubr.bf16.mxu0 0
      %905 = vmatmul.mubr.bf16.gmra.mxu0 %v800
      %v906 = vpop.f32.mrf.mxu0
      %v907 = vadd.f32 0.0, %v906
      %v908 = vpop.f32.mrf.mxu0
      %v909 = vpop.f32.mrf.mxu0
      %v910 = vadd.f32 0.0, %v909
      %v911 = vpop.f32.mrf.mxu0
      %912 = vmatprep.mubr.bf16.mxu0 0
      %913 = vmatmul.mubr.bf16.gmra.mxu0 %v801
      %v914 = vpop.f32.mrf.mxu0
      %v915 = vadd.f32 0.0, %v914
      %v916 = vpop.f32.mrf.mxu0
      %v917 = vpop.f32.mrf.mxu0
      %v918 = vadd.f32 0.0, %v917
      %v919 = vpop.f32.mrf.mxu0
      %920 = vmatprep.mubr.bf16.mxu0 0
      %921 = vmatmul.mubr.bf16.gmra.mxu0 %v802
      %v922 = vpop.f32.mrf.mxu0
      %v923 = vadd.f32 0.0, %v922
      %v924 = vpop.f32.mrf.mxu0
      %v925 = vpop.f32.mrf.mxu0
      %v926 = vadd.f32 0.0, %v925
      %v927 = vpop.f32.mrf.mxu0
      %928 = vmatprep.mubr.bf16.mxu0 0
      %929 = vmatmul.mubr.bf16.gmra.mxu0 %v803
      %v930 = vpop.f32.mrf.mxu0
      %v931 = vadd.f32 0.0, %v930
      %v932 = vpop.f32.mrf.mxu0
      %v933 = vpop.f32.mrf.mxu0
      %v934 = vadd.f32 0.0, %v933
      %v935 = vpop.f32.mrf.mxu0
      %936 = vmatprep.mubr.bf16.mxu0 0
      %937 = vmatmul.mubr.bf16.gmra.mxu0 %v804
      %v938 = vpop.f32.mrf.mxu0
      %v939 = vadd.f32 0.0, %v938
      %v940 = vpop.f32.mrf.mxu0
      %v941 = vpop.f32.mrf.mxu0
      %v942 = vadd.f32 0.0, %v941
      %v943 = vpop.f32.mrf.mxu0
      %944 = vmatprep.mubr.bf16.mxu0 0
      %945 = vmatmul.mubr.bf16.gmra.mxu0 %v805
      %v946 = vpop.f32.mrf.mxu0
      %v947 = vadd.f32 0.0, %v946
      %v948 = vpop.f32.mrf.mxu0
      %v949 = vpop.f32.mrf.mxu0
      %v950 = vadd.f32 0.0, %v949
      %v951 = vpop.f32.mrf.mxu0
      %952 = vmatprep.mubr.bf16.mxu0 0
      %953 = vmatmul.mubr.bf16.gmra.mxu0 %v806
      %v954 = vpop.f32.mrf.mxu0
      %v955 = vadd.f32 0.0, %v954
      %v956 = vpop.f32.mrf.mxu0
      %v957 = vpop.f32.mrf.mxu0
      %v958 = vadd.f32 0.0, %v957
      %v959 = vpop.f32.mrf.mxu0
      %960 = vmatprep.mubr.bf16.mxu0 0
      %961 = vmatmul.mubr.bf16.gmra.mxu0 %v807
      %v962 = vpop.f32.mrf.mxu0
      %v963 = vadd.f32 0.0, %v962
      %v964 = vpop.f32.mrf.mxu0
      %v965 = vpop.f32.mrf.mxu0
      %v966 = vadd.f32 0.0, %v965
      %v967 = vpop.f32.mrf.mxu0
      %968 = vdwg.mxu0
      %v969 = vpack.c.bf16 %v910, %v907
      %v970 = vpack.c.bf16 %v918, %v915
      %v971 = vpack.c.bf16 %v926, %v923
      %v972 = vpack.c.bf16 %v934, %v931
      %v973 = vpack.c.bf16 %v942, %v939
      %v974 = vpack.c.bf16 %v950, %v947
      %v975 = vpack.c.bf16 %v958, %v955
      %v976 = vpack.c.bf16 %v966, %v963
      %v985 = vunpack.c.l.b16 %v969
      %v986 = vunpack.c.h.b16 %v969
      %v987 = vunpack.c.l.b16 %v970
      %v988 = vunpack.c.h.b16 %v970
      %v989 = vunpack.c.l.b16 %v971
      %v990 = vunpack.c.h.b16 %v971
      %v991 = vunpack.c.l.b16 %v972
      %v992 = vunpack.c.h.b16 %v972
      %v993 = vunpack.c.l.b16 %v973
      %v994 = vunpack.c.h.b16 %v973
      %v995 = vunpack.c.l.b16 %v974
      %v996 = vunpack.c.h.b16 %v974
      %v997 = vunpack.c.l.b16 %v975
      %v998 = vunpack.c.h.b16 %v975
      %v999 = vunpack.c.l.b16 %v976
      %v1000 = vunpack.c.h.b16 %v976
      %v1001 = vpack.c.b16 %v985, %v985
      %v1002 = vpack.c.b16 %v986, %v986
      %v1003 = vpack.c.b16 %v987, %v987
      %v1004 = vpack.c.b16 %v988, %v988
      %v1005 = vpack.c.b16 %v989, %v989
      %v1006 = vpack.c.b16 %v990, %v990
      %v1007 = vpack.c.b16 %v991, %v991
      %v1008 = vpack.c.b16 %v992, %v992
      %v1009 = vpack.c.b16 %v993, %v993
      %v1010 = vpack.c.b16 %v994, %v994
      %v1011 = vpack.c.b16 %v995, %v995
      %v1012 = vpack.c.b16 %v996, %v996
      %v1013 = vpack.c.b16 %v997, %v997
      %v1014 = vpack.c.b16 %v998, %v998
      %v1015 = vpack.c.b16 %v999, %v999
      %v1016 = vpack.c.b16 %v1000, %v1000
      %1033 = vst [vmem:[%s226] sm:$0xf] %v1001
      %1034 = vst [vmem:[%s226 + $0x4] sm:$0xf] %v1002
      %1035 = vst [vmem:[%s226 + $0x8] sm:$0xf] %v1003
      %1036 = vst [vmem:[%s226 + $0xc] sm:$0xf] %v1004
      %1037 = vst [vmem:[%s226 + $0x10] sm:$0xf] %v1005
      %1038 = vst [vmem:[%s226 + $0x14] sm:$0xf] %v1006
      %1039 = vst [vmem:[%s226 + $0x18] sm:$0xf] %v1007
      %1040 = vst [vmem:[%s226 + $0x1c] sm:$0xf] %v1008
      %1041 = vst [vmem:[%s226 + $0x20] sm:$0xf] %v1009
      %1042 = vst [vmem:[%s226 + $0x24] sm:$0xf] %v1010
      %1043 = vst [vmem:[%s226 + $0x28] sm:$0xf] %v1011
      %1044 = vst [vmem:[%s226 + $0x2c] sm:$0xf] %v1012
      %1045 = vst [vmem:[%s226 + $0x30] sm:$0xf] %v1013
      %1046 = vst [vmem:[%s226 + $0x34] sm:$0xf] %v1014
      %1047 = vst [vmem:[%s226 + $0x38] sm:$0xf] %v1015
      %1048 = vst [vmem:[%s226 + $0x3c] sm:$0xf] %v1016
      %s1049 = smul.u32 16, %s16
      %p1050 = scmp.lt.s32.totalorder %s1049, 31
      %s1051 = scalar_select %p1050, %s1049, 31
      %s1052 = smul.addr %s1051, 4
      %s1053 = scalar_lea.vmem %s5, %s1052
      // Predicated region
      $region41: #{_forward.1} parent=39 // pred_check
        %p1054 = pneg %p144
      $region42: #{_forward.1} parent=39 // pred_check_branch
        %1056 = sbr.rel (%p1054) target = $region44
      $region43: #{_forward.1} parent=39 // pred_region
        %s1057 = smul.u32 16, %s16
      $region44: #{_forward.1} parent=39 // pred_fallthru
        _
    $region40: #{_forward.1} parent=5 // pred_fallthru
      _
    %p1058 = scmp.le.s32.totalorder 2, %s11
    // Predicated region
    $region45: #{_forward.1} parent=5 // pred_check
      %p1059 = pneg %p1058
    $region46: #{_forward.1} parent=5 // pred_check_branch
      %1061 = sbr.rel (%p1059) target = $region48
    $region47: #{_forward.1} parent=5 // pred_region
      %s1062 = ssub.s32 %s11, 2
      // Predicated region
      $region49: #{_forward.1} parent=47 // pred_check
        %p1063 = pneg %p150
      $region50: #{_forward.1} parent=47 // pred_check_branch
        %1065 = sbr.rel (%p1063) target = $region52
      $region51: #{_forward.1} parent=47 // pred_region
        %s1066 = smul.u32 16, %s17
        %p1067 = scmp.lt.s32.totalorder %s1066, 31
        %s1068 = scalar_select %p1067, %s1066, 31
        %s1069 = smul.addr %s1068, 4
        %s1070 = scalar_lea.vmem %s5, %s1069
      $region52: #{_forward.1} parent=47 // pred_fallthru
        _
    $region48: #{_forward.1} parent=5 // pred_fallthru
      _
  $region6: #{_forward.1} parent=0 // loop_footer
    %s15 = sadd.s32 1, %s11
  $region7: #{_forward.1} parent=0 // loop_footer_branch
    %10 = sbr.rel target = $region3
  $region8: #{_forward.1} parent=0 // loop_exit
    _

</llo_original>
